<compile_context>
chip_gen: v7x
topology: tpu7x:2x2x1
jax: 0.10.0
libtpu: 0.0.40
codegen_flags: <defaults>
</compile_context>

<pallas_src>
import functools

import jax
import jax.numpy as jnp
from jax.experimental import pallas as pl
from jax.experimental.pallas import tpu as pltpu

KH, KW = 4, 4
BN_EPS = 1e-5


def _pick_c_tile(C):
    """Channels per grid tile (per GLU half). Prefer >=32 channels (>=512 lanes/half)."""
    for ct in (64, 48, 32, 16, 8):
        if C % ct == 0:
            return ct
    return C  # tiny / non-multiple-of-8 channel counts: single tile


def _spectral_sigma(weight):
    """Top-singular-value estimate via 1-step power iteration (torch spectral_norm,
    dim=1 for ConvTranspose2d). TODO(synk): torch refines a persistent `u` buffer every
    forward; here `u` is re-initialized deterministically, so sigma differs slightly
    (train-mode BatchNorm cancels the scale, so the forward output is unaffected)."""
    two_c = weight.shape[1]
    w_mat = jnp.transpose(weight, (1, 0, 2, 3)).reshape(two_c, -1)  # (2C, nz*kh*kw)
    u = jax.random.normal(jax.random.PRNGKey(0), (two_c,), jnp.float32)
    u = u / (jnp.linalg.norm(u) + 1e-12)
    v = w_mat.T @ u
    v = v / (jnp.linalg.norm(v) + 1e-12)
    u = w_mat @ v
    u = u / (jnp.linalg.norm(u) + 1e-12)
    return jnp.dot(u, w_mat @ v)


def _init_layer_kernel(noise_ref, wv_ref, wg_ref, s_ref, st_ref,
                       gv_ref, gg_ref, bv_ref, bg_ref, out_ref, *, inv_count):
    """One channel tile: matmul (value+gate halves) + train-mode BN + GLU, all lane-dense.

    noise:(B_pad,nz)  wv/wg:(nz,Ct*16)  S:(Ct*16,Ct)  S.T:(Ct,Ct*16)
    gv/gg/bv/bg:(1,Ct*16)  out:(B_pad,Ct*16)
    """
    f32 = jnp.float32
    noise = noise_ref[...]

    # ConvTranspose2d on a 1x1 spatial input == matmul (MXU). f32 accumulation.
    y_val = jnp.dot(noise, wv_ref[...], preferred_element_type=f32)   # (B_pad, Ct*16)
    y_gate = jnp.dot(noise, wg_ref[...], preferred_element_type=f32)  # (B_pad, Ct*16)

    seg = s_ref[...]     # one-hot segment matrix: lane k belongs to channel k // 16
    seg_t = st_ref[...]  # its transpose, for broadcasting channel stats back to lanes

    def batchnorm(y, gamma_lane, beta_lane):
        # Batch sums via MXU (padded batch rows of `noise` are zero, so they drop out).
        ones_row = jnp.ones((1, y.shape[0]), f32)
        s1 = jnp.dot(ones_row, y, preferred_element_type=f32)          # (1, Ct*16)
        s2 = jnp.dot(ones_row, y * y, preferred_element_type=f32)      # (1, Ct*16)
        # Per-channel (segment) reduction of the 16 spatial lanes, also on the MXU.
        mean_c = jnp.dot(s1, seg, preferred_element_type=f32) * inv_count   # (1, Ct)
        ex2_c = jnp.dot(s2, seg, preferred_element_type=f32) * inv_count    # (1, Ct)
        var_c = ex2_c - mean_c * mean_c                    # biased variance (train mode)
        invstd_c = jax.lax.rsqrt(var_c + BN_EPS)
        # Broadcast per-channel stats back to the 16-lane groups.
        mean_lane = jnp.dot(mean_c, seg_t, preferred_element_type=f32)      # (1, Ct*16)
        invstd_lane = jnp.dot(invstd_c, seg_t, preferred_element_type=f32)  # (1, Ct*16)
        scale = invstd_lane * gamma_lane
        shift = beta_lane - mean_lane * scale
        return y * scale + shift                            # lane-aligned VPU affine

    yn_val = batchnorm(y_val, gv_ref[...], bv_ref[...])
    yn_gate = batchnorm(y_gate, gg_ref[...], bg_ref[...])

    # GLU: value half * sigmoid(gate half); halves arrive as separate lane-dense refs.
    out_ref[...] = (yn_val * jax.nn.sigmoid(yn_gate)).astype(out_ref.dtype)


def init_layer_forward(noise, weight, gamma, beta, *, use_bf16_matmul=False):
    """noise: (B, nz) or (B, nz, 1, 1); weight: (nz, 2C, 4, 4) (ConvTranspose2d layout)."""
    B = noise.shape[0]
    nz, two_c, kh, kw = weight.shape
    C = two_c // 2
    hw = kh * kw
    n_half = C * hw

    noise2 = noise.reshape(B, -1).astype(jnp.float32)

    # Spectral norm: fold 1/sigma into the tiny noise tensor instead of rescaling the
    # whole weight (the conv is linear in the weight, so this is exact).
    sigma = _spectral_sigma(weight)
    noise2 = noise2 * (1.0 / sigma)

    # Pad the batch to a multiple of 8 f32 sublanes; padded rows are zero so BN batch
    # sums are unaffected. Denominators below use the REAL batch size.
    b_pad = max(8, ((B + 7) // 8) * 8)
    if b_pad != B:
        noise2 = jnp.pad(noise2, ((0, b_pad - B), (0, 0)))

    # Flatten ConvTranspose weight to the matmul view (contiguous reshape, no data move).
    w2 = weight.reshape(nz, two_c * hw).astype(jnp.float32)

    # Pre-expand BN affine params to lane layout: channel c occupies lanes [c*16,(c+1)*16).
    gamma_lane = jnp.repeat(gamma.astype(jnp.float32), hw)[None, :]   # (1, 2C*16)
    beta_lane = jnp.repeat(beta.astype(jnp.float32), hw)[None, :]     # (1, 2C*16)

    # Channel tiling (per GLU half). Each grid step handles c_tile value channels plus
    # their matching gate channels so the GLU pairing stays inside one step.
    c_tile = _pick_c_tile(C)
    num_tiles = C // c_tile
    n_tile = c_tile * hw

    # Static one-hot segment matrix for the per-channel spatial reduction / broadcast.
    seg = (jnp.arange(n_tile)[:, None] // hw
           == jnp.arange(c_tile)[None, :]).astype(jnp.float32)        # (n_tile, c_tile)
    seg_t = seg.T                                                     # (c_tile, n_tile)

    # Optional bf16 MXU inputs (v6e/v7x production knob); accumulation & BN stay f32.
    mm_dtype = jnp.bfloat16 if use_bf16_matmul else jnp.float32
    noise_in = noise2.astype(mm_dtype)
    w_in = w2.astype(mm_dtype)

    if c_tile % 8 == 0:
        # Tiled path: pass the same weight / affine arrays twice; the gate half is
        # addressed by offsetting the block index by num_tiles. No extra copies.
        w_val_arr, w_gate_arr = w_in, w_in
        g_val_arr, g_gate_arr = gamma_lane, gamma_lane
        b_val_arr, b_gate_arr = beta_lane, beta_lane
        val_map = lambda j: (0, j)
        gate_map = lambda j: (0, j + num_tiles)
    else:
        # Tiny / non-multiple-of-8 channel counts (toy sizes): split the halves once in
        # the wrapper so every block spans its full array (satisfies the (8,128) rule).
        w_val_arr, w_gate_arr = w_in[:, :n_half], w_in[:, n_half:]
        g_val_arr, g_gate_arr = gamma_lane[:, :n_half], gamma_lane[:, n_half:]
        b_val_arr, b_gate_arr = beta_lane[:, :n_half], beta_lane[:, n_half:]
        val_map = lambda j: (0, j)
        gate_map = lambda j: (0, j)

    kernel = functools.partial(_init_layer_kernel, inv_count=1.0 / (B * hw))

    # NOTE: at toy sizes (C=4) the output tile is only 64 lanes wide -> masked stores;
    # at production sizes C*16 >= 128 and every tile is lane-dense.
    out_flat = pl.pallas_call(
        kernel,
        out_shape=jax.ShapeDtypeStruct((b_pad, C * hw), jnp.float32),
        grid=(num_tiles,),
        in_specs=[
            pl.BlockSpec((b_pad, nz), lambda j: (0, 0)),        # noise (resident)
            pl.BlockSpec((nz, n_tile), val_map),                # weight, value half tile
            pl.BlockSpec((nz, n_tile), gate_map),               # weight, gate half tile
            pl.BlockSpec((n_tile, c_tile), lambda j: (0, 0)),   # segment matrix S
            pl.BlockSpec((c_tile, n_tile), lambda j: (0, 0)),   # S.T
            pl.BlockSpec((1, n_tile), val_map),                 # gamma, value half
            pl.BlockSpec((1, n_tile), gate_map),                # gamma, gate half
            pl.BlockSpec((1, n_tile), val_map),                 # beta, value half
            pl.BlockSpec((1, n_tile), gate_map),                # beta, gate half
        ],
        out_specs=pl.BlockSpec((b_pad, n_tile), lambda j: (0, j)),
        compiler_params=pltpu.CompilerParams(
            dimension_semantics=("parallel",),                  # megacore-shard channel tiles
            vmem_limit_bytes=32 * 1024 * 1024,
        ),
    )(noise_in, w_val_arr, w_gate_arr, seg, seg_t,
      g_val_arr, g_gate_arr, b_val_arr, b_gate_arr)

    return out_flat[:B].reshape(B, C, kh, kw)   # NCHW, matches PyTorch output layout


def init_layer_reference(noise, weight, gamma, beta):
    """Pure-JAX reference of InitLayer.forward (training-mode BatchNorm)."""
    B = noise.shape[0]
    noise2 = noise.reshape(B, -1).astype(jnp.float32)
    nz, two_c, kh, kw = weight.shape
    sigma = _spectral_sigma(weight)
    w_sn = weight / sigma
    # ConvTranspose: out[b, oc, i, j] = sum_z noise[b, z] * w[z, oc, i, j]
    y = jnp.einsum("bz,zoij->boij", noise2, w_sn)             # (B, 2C, 4, 4)
    mean = jnp.mean(y, axis=(0, 2, 3), keepdims=True)
    var = jnp.mean((y - mean) ** 2, axis=(0, 2, 3), keepdims=True)
    yn = (y - mean) / jnp.sqrt(var + BN_EPS)
    yn = yn * gamma.reshape(1, two_c, 1, 1) + beta.reshape(1, two_c, 1, 1)
    c = two_c // 2
    return yn[:, :c] * jax.nn.sigmoid(yn[:, c:])


if __name__ == "__main__":
    # Small shapes consistent with the module: nz=32, channel=4 -> output (B, 4, 4, 4)
    B, nz, channel = 2, 32, 4
    two_c = channel * 2

    key = jax.random.PRNGKey(0)
    k_noise, k_w = jax.random.split(key)

    noise = jax.random.normal(k_noise, (B, nz), dtype=jnp.float32)
    # ConvTranspose2d weight layout: (in_channels, out_channels, kH, kW)
    weight = 0.1 * jax.random.normal(k_w, (nz, two_c, KH, KW), dtype=jnp.float32)
    # BatchNorm2d default affine init
    gamma = jnp.ones((two_c,), dtype=jnp.float32)
    beta = jnp.zeros((two_c,), dtype=jnp.float32)

    out = jax.block_until_ready(init_layer_forward(noise, weight, gamma, beta))
    ref = init_layer_reference(noise, weight, gamma, beta)
    assert out.shape == (B, channel, KH, KW), out.shape
    assert jnp.allclose(out, ref, atol=1e-4, rtol=1e-4), float(jnp.max(jnp.abs(out - ref)))

    # Production knob: bf16 MXU inputs (v6e/v7x) -- BN/GLU math stays f32 in-kernel.
    out_bf16 = jax.block_until_ready(
        init_layer_forward(noise, weight, gamma, beta, use_bf16_matmul=True))
    assert jnp.allclose(out_bf16, ref, atol=1e-1, rtol=1e-1), \
        float(jnp.max(jnp.abs(out_bf16 - ref)))

    print("KERNEL_OK")
</pallas_src>

<mosaic_0001>
module attributes {stable_mosaic.version = 11 : i64} {
  func.func @_init_layer_kernel(%arg0: i32, %arg1: memref<8x32xf32, #tpu.memory_space<vmem>>, %arg2: memref<32x64xf32, #tpu.memory_space<vmem>>, %arg3: memref<32x64xf32, #tpu.memory_space<vmem>>, %arg4: memref<64x4xf32, #tpu.memory_space<vmem>>, %arg5: memref<4x64xf32, #tpu.memory_space<vmem>>, %arg6: memref<1x64xf32, #tpu.memory_space<vmem>>, %arg7: memref<1x64xf32, #tpu.memory_space<vmem>>, %arg8: memref<1x64xf32, #tpu.memory_space<vmem>>, %arg9: memref<1x64xf32, #tpu.memory_space<vmem>>, %arg10: memref<8x64xf32, #tpu.memory_space<vmem>>) attributes {dimension_semantics = [#tpu.dimension_semantics<parallel>], iteration_bounds = array<i64: 1>, scalar_prefetch = 0 : i64, scratch_operands = 0 : i64, tpu.core_type = #tpu.core_type<tc>, window_params = [{pipeline_mode = #tpu.pipeline_mode<synchronous>, transform_indices = @transform_0, window_bounds = array<i64: 8, 32>}, {transform_indices = @transform_1, window_bounds = array<i64: 32, 64>}, {transform_indices = @transform_2, window_bounds = array<i64: 32, 64>}, {pipeline_mode = #tpu.pipeline_mode<synchronous>, transform_indices = @transform_3, window_bounds = array<i64: 64, 4>}, {pipeline_mode = #tpu.pipeline_mode<synchronous>, transform_indices = @transform_4, window_bounds = array<i64: 4, 64>}, {transform_indices = @transform_5, window_bounds = array<i64: 1, 64>}, {transform_indices = @transform_6, window_bounds = array<i64: 1, 64>}, {transform_indices = @transform_7, window_bounds = array<i64: 1, 64>}, {transform_indices = @transform_8, window_bounds = array<i64: 1, 64>}, {transform_indices = @transform_9, window_bounds = array<i64: 8, 64>}]} {
    %c0 = arith.constant 0 : index
    %c0_0 = arith.constant 0 : index
    %0 = vector.load %arg1[%c0, %c0_0] : memref<8x32xf32, #tpu.memory_space<vmem>>, vector<8x32xf32>
    %c0_1 = arith.constant 0 : index
    %c0_2 = arith.constant 0 : index
    %1 = vector.load %arg2[%c0_1, %c0_2] : memref<32x64xf32, #tpu.memory_space<vmem>>, vector<32x64xf32>
    %cst = arith.constant dense<0.000000e+00> : vector<8x64xf32>
    %2 = tpu.matmul %0, %1, %cst {dimension_numbers = #tpu.dot_dimension_numbers<[1], [0], [0], [1], [0, 0, 1, 1], [], []>} : vector<8x32xf32>, vector<32x64xf32>, vector<8x64xf32> -> vector<8x64xf32>
    %c0_3 = arith.constant 0 : index
    %c0_4 = arith.constant 0 : index
    %3 = vector.load %arg3[%c0_3, %c0_4] : memref<32x64xf32, #tpu.memory_space<vmem>>, vector<32x64xf32>
    %cst_5 = arith.constant dense<0.000000e+00> : vector<8x64xf32>
    %4 = tpu.matmul %0, %3, %cst_5 {dimension_numbers = #tpu.dot_dimension_numbers<[1], [0], [0], [1], [0, 0, 1, 1], [], []>} : vector<8x32xf32>, vector<32x64xf32>, vector<8x64xf32> -> vector<8x64xf32>
    %c0_6 = arith.constant 0 : index
    %c0_7 = arith.constant 0 : index
    %5 = vector.load %arg4[%c0_6, %c0_7] : memref<64x4xf32, #tpu.memory_space<vmem>>, vector<64x4xf32>
    %c0_8 = arith.constant 0 : index
    %c0_9 = arith.constant 0 : index
    %6 = vector.load %arg5[%c0_8, %c0_9] : memref<4x64xf32, #tpu.memory_space<vmem>>, vector<4x64xf32>
    %c0_10 = arith.constant 0 : index
    %c0_11 = arith.constant 0 : index
    %7 = vector.load %arg6[%c0_10, %c0_11] : memref<1x64xf32, #tpu.memory_space<vmem>>, vector<1x64xf32>
    %c0_12 = arith.constant 0 : index
    %c0_13 = arith.constant 0 : index
    %8 = vector.load %arg8[%c0_12, %c0_13] : memref<1x64xf32, #tpu.memory_space<vmem>>, vector<1x64xf32>
    %cst_14 = arith.constant 1.000000e+00 : f32
    %9 = vector.broadcast %cst_14 : f32 to vector<1x8xf32>
    %cst_15 = arith.constant dense<0.000000e+00> : vector<1x64xf32>
    %10 = tpu.matmul %9, %2, %cst_15 {dimension_numbers = #tpu.dot_dimension_numbers<[1], [0], [0], [1], [0, 0, 1, 1], [], []>} : vector<1x8xf32>, vector<8x64xf32>, vector<1x64xf32> -> vector<1x64xf32>
    %11 = arith.mulf %2, %2 : vector<8x64xf32>
    %cst_16 = arith.constant dense<0.000000e+00> : vector<1x64xf32>
    %12 = tpu.matmul %9, %11, %cst_16 {dimension_numbers = #tpu.dot_dimension_numbers<[1], [0], [0], [1], [0, 0, 1, 1], [], []>} : vector<1x8xf32>, vector<8x64xf32>, vector<1x64xf32> -> vector<1x64xf32>
    %cst_17 = arith.constant dense<0.000000e+00> : vector<1x4xf32>
    %13 = tpu.matmul %10, %5, %cst_17 {dimension_numbers = #tpu.dot_dimension_numbers<[1], [0], [0], [1], [0, 0, 1, 1], [], []>} : vector<1x64xf32>, vector<64x4xf32>, vector<1x4xf32> -> vector<1x4xf32>
    %cst_18 = arith.constant 3.125000e-02 : f32
    %14 = vector.broadcast %cst_18 : f32 to vector<1x4xf32>
    %15 = arith.mulf %13, %14 : vector<1x4xf32>
    %cst_19 = arith.constant dense<0.000000e+00> : vector<1x4xf32>
    %16 = tpu.matmul %12, %5, %cst_19 {dimension_numbers = #tpu.dot_dimension_numbers<[1], [0], [0], [1], [0, 0, 1, 1], [], []>} : vector<1x64xf32>, vector<64x4xf32>, vector<1x4xf32> -> vector<1x4xf32>
    %cst_20 = arith.constant 3.125000e-02 : f32
    %17 = vector.broadcast %cst_20 : f32 to vector<1x4xf32>
    %18 = arith.mulf %16, %17 : vector<1x4xf32>
    %19 = arith.mulf %15, %15 : vector<1x4xf32>
    %20 = arith.subf %18, %19 : vector<1x4xf32>
    %cst_21 = arith.constant 9.99999974E-6 : f32
    %21 = vector.broadcast %cst_21 : f32 to vector<1x4xf32>
    %22 = arith.addf %20, %21 : vector<1x4xf32>
    %23 = math.rsqrt %22 : vector<1x4xf32>
    %cst_22 = arith.constant dense<0.000000e+00> : vector<1x64xf32>
    %24 = tpu.matmul %15, %6, %cst_22 {dimension_numbers = #tpu.dot_dimension_numbers<[1], [0], [0], [1], [0, 0, 1, 1], [], []>} : vector<1x4xf32>, vector<4x64xf32>, vector<1x64xf32> -> vector<1x64xf32>
    %cst_23 = arith.constant dense<0.000000e+00> : vector<1x64xf32>
    %25 = tpu.matmul %23, %6, %cst_23 {dimension_numbers = #tpu.dot_dimension_numbers<[1], [0], [0], [1], [0, 0, 1, 1], [], []>} : vector<1x4xf32>, vector<4x64xf32>, vector<1x64xf32> -> vector<1x64xf32>
    %26 = arith.mulf %25, %7 : vector<1x64xf32>
    %27 = arith.mulf %24, %26 : vector<1x64xf32>
    %28 = arith.subf %8, %27 : vector<1x64xf32>
    %29 = vector.broadcast %26 : vector<1x64xf32> to vector<8x64xf32>
    %30 = arith.mulf %2, %29 : vector<8x64xf32>
    %31 = vector.broadcast %28 : vector<1x64xf32> to vector<8x64xf32>
    %32 = arith.addf %30, %31 : vector<8x64xf32>
    %c0_24 = arith.constant 0 : index
    %c0_25 = arith.constant 0 : index
    %33 = vector.load %arg7[%c0_24, %c0_25] : memref<1x64xf32, #tpu.memory_space<vmem>>, vector<1x64xf32>
    %c0_26 = arith.constant 0 : index
    %c0_27 = arith.constant 0 : index
    %34 = vector.load %arg9[%c0_26, %c0_27] : memref<1x64xf32, #tpu.memory_space<vmem>>, vector<1x64xf32>
    %cst_28 = arith.constant 1.000000e+00 : f32
    %35 = vector.broadcast %cst_28 : f32 to vector<1x8xf32>
    %cst_29 = arith.constant dense<0.000000e+00> : vector<1x64xf32>
    %36 = tpu.matmul %35, %4, %cst_29 {dimension_numbers = #tpu.dot_dimension_numbers<[1], [0], [0], [1], [0, 0, 1, 1], [], []>} : vector<1x8xf32>, vector<8x64xf32>, vector<1x64xf32> -> vector<1x64xf32>
    %37 = arith.mulf %4, %4 : vector<8x64xf32>
    %cst_30 = arith.constant dense<0.000000e+00> : vector<1x64xf32>
    %38 = tpu.matmul %35, %37, %cst_30 {dimension_numbers = #tpu.dot_dimension_numbers<[1], [0], [0], [1], [0, 0, 1, 1], [], []>} : vector<1x8xf32>, vector<8x64xf32>, vector<1x64xf32> -> vector<1x64xf32>
    %cst_31 = arith.constant dense<0.000000e+00> : vector<1x4xf32>
    %39 = tpu.matmul %36, %5, %cst_31 {dimension_numbers = #tpu.dot_dimension_numbers<[1], [0], [0], [1], [0, 0, 1, 1], [], []>} : vector<1x64xf32>, vector<64x4xf32>, vector<1x4xf32> -> vector<1x4xf32>
    %cst_32 = arith.constant 3.125000e-02 : f32
    %40 = vector.broadcast %cst_32 : f32 to vector<1x4xf32>
    %41 = arith.mulf %39, %40 : vector<1x4xf32>
    %cst_33 = arith.constant dense<0.000000e+00> : vector<1x4xf32>
    %42 = tpu.matmul %38, %5, %cst_33 {dimension_numbers = #tpu.dot_dimension_numbers<[1], [0], [0], [1], [0, 0, 1, 1], [], []>} : vector<1x64xf32>, vector<64x4xf32>, vector<1x4xf32> -> vector<1x4xf32>
    %cst_34 = arith.constant 3.125000e-02 : f32
    %43 = vector.broadcast %cst_34 : f32 to vector<1x4xf32>
    %44 = arith.mulf %42, %43 : vector<1x4xf32>
    %45 = arith.mulf %41, %41 : vector<1x4xf32>
    %46 = arith.subf %44, %45 : vector<1x4xf32>
    %cst_35 = arith.constant 9.99999974E-6 : f32
    %47 = vector.broadcast %cst_35 : f32 to vector<1x4xf32>
    %48 = arith.addf %46, %47 : vector<1x4xf32>
    %49 = math.rsqrt %48 : vector<1x4xf32>
    %cst_36 = arith.constant dense<0.000000e+00> : vector<1x64xf32>
    %50 = tpu.matmul %41, %6, %cst_36 {dimension_numbers = #tpu.dot_dimension_numbers<[1], [0], [0], [1], [0, 0, 1, 1], [], []>} : vector<1x4xf32>, vector<4x64xf32>, vector<1x64xf32> -> vector<1x64xf32>
    %cst_37 = arith.constant dense<0.000000e+00> : vector<1x64xf32>
    %51 = tpu.matmul %49, %6, %cst_37 {dimension_numbers = #tpu.dot_dimension_numbers<[1], [0], [0], [1], [0, 0, 1, 1], [], []>} : vector<1x4xf32>, vector<4x64xf32>, vector<1x64xf32> -> vector<1x64xf32>
    %52 = arith.mulf %51, %33 : vector<1x64xf32>
    %53 = arith.mulf %50, %52 : vector<1x64xf32>
    %54 = arith.subf %34, %53 : vector<1x64xf32>
    %55 = vector.broadcast %52 : vector<1x64xf32> to vector<8x64xf32>
    %56 = arith.mulf %4, %55 : vector<8x64xf32>
    %57 = vector.broadcast %54 : vector<1x64xf32> to vector<8x64xf32>
    %58 = arith.addf %56, %57 : vector<8x64xf32>
    %59 = arith.negf %58 : vector<8x64xf32>
    %60 = math.exp %59 : vector<8x64xf32>
    %cst_38 = arith.constant 1.000000e+00 : f32
    %61 = vector.broadcast %cst_38 : f32 to vector<8x64xf32>
    %62 = arith.addf %61, %60 : vector<8x64xf32>
    %63 = arith.divf %61, %62 : vector<8x64xf32>
    %64 = arith.mulf %32, %63 : vector<8x64xf32>
    %c0_39 = arith.constant 0 : index
    %c0_40 = arith.constant 0 : index
    %65 = vector.load %arg10[%c0_39, %c0_40] : memref<8x64xf32, #tpu.memory_space<vmem>>, vector<8x64xf32>
    tpu.vector_store %arg10[%c0_39, %c0_40], %64 {strides = array<i32>} : memref<8x64xf32, #tpu.memory_space<vmem>>, vector<8x64xf32>,
    return
  }
  func.func @transform_0(%arg0: i32) -> (i32, i32) {
    %c0_i32 = arith.constant 0 : i32
    %c0_i32_0 = arith.constant 0 : i32
    %c0_i32_1 = arith.constant 0 : i32
    return %c0_i32, %c0_i32_0 : i32, i32
  }
  func.func @transform_1(%arg0: i32) -> (i32, i32) {
    %c0_i32 = arith.constant 0 : i32
    %c0_i32_0 = arith.constant 0 : i32
    return %c0_i32, %arg0 : i32, i32
  }
  func.func @transform_2(%arg0: i32) -> (i32, i32) {
    %c0_i32 = arith.constant 0 : i32
    %c0_i32_0 = arith.constant 0 : i32
    return %c0_i32, %arg0 : i32, i32
  }
  func.func @transform_3(%arg0: i32) -> (i32, i32) {
    %c0_i32 = arith.constant 0 : i32
    %c0_i32_0 = arith.constant 0 : i32
    %c0_i32_1 = arith.constant 0 : i32
    return %c0_i32, %c0_i32_0 : i32, i32
  }
  func.func @transform_4(%arg0: i32) -> (i32, i32) {
    %c0_i32 = arith.constant 0 : i32
    %c0_i32_0 = arith.constant 0 : i32
    %c0_i32_1 = arith.constant 0 : i32
    return %c0_i32, %c0_i32_0 : i32, i32
  }
  func.func @transform_5(%arg0: i32) -> (i32, i32) {
    %c0_i32 = arith.constant 0 : i32
    %c0_i32_0 = arith.constant 0 : i32
    return %c0_i32, %arg0 : i32, i32
  }
  func.func @transform_6(%arg0: i32) -> (i32, i32) {
    %c0_i32 = arith.constant 0 : i32
    %c0_i32_0 = arith.constant 0 : i32
    return %c0_i32, %arg0 : i32, i32
  }
  func.func @transform_7(%arg0: i32) -> (i32, i32) {
    %c0_i32 = arith.constant 0 : i32
    %c0_i32_0 = arith.constant 0 : i32
    return %c0_i32, %arg0 : i32, i32
  }
  func.func @transform_8(%arg0: i32) -> (i32, i32) {
    %c0_i32 = arith.constant 0 : i32
    %c0_i32_0 = arith.constant 0 : i32
    return %c0_i32, %arg0 : i32, i32
  }
  func.func @transform_9(%arg0: i32) -> (i32, i32) {
    %c0_i32 = arith.constant 0 : i32
    %c0_i32_0 = arith.constant 0 : i32
    return %c0_i32, %arg0 : i32, i32
  }
}

</mosaic_0001>

<llo_original>
// kernel: tpu_custom_call.1
$region0: #{tpu_custom_call.1}
  #allocation0 [shape = 'u32[]', space=smem, size = 0x4, offset = 0x4, fixed_abs, tag = 'smem constant byte address 0x4 - core index']
  #allocation1 [shape = 'u32[144,128]{1,0:T(1,128)}', space=vmem, size = 0x12000, scoped, tag = 'internal scratch']
  %s0 = inlined_call_operand.hbm [shape: f32[8,32], index: 0, kind: input, shape index: {}]
  %s1 = inlined_call_operand.vmem [shape: f32[32,64], index: 1, kind: input, shape index: {}]
  %s2 = inlined_call_operand.vmem [shape: f32[32,64], index: 2, kind: input, shape index: {}]
  %s3 = inlined_call_operand.vmem [shape: f32[64,4], index: 3, kind: input, shape index: {}]
  %s4 = inlined_call_operand.vmem [shape: f32[4,64], index: 4, kind: input, shape index: {}]
  %s5 = inlined_call_operand.vmem [shape: f32[1,64], index: 5, kind: input, shape index: {}]
  %s6 = inlined_call_operand.vmem [shape: f32[1,64], index: 6, kind: input, shape index: {}]
  %s7 = inlined_call_operand.vmem [shape: f32[1,64], index: 7, kind: input, shape index: {}]
  %s8 = inlined_call_operand.vmem [shape: f32[1,64], index: 8, kind: input, shape index: {}]
  %s9 = inlined_call_operand.hbm [shape: f32[8,64], index: 9, kind: output, shape index: {}]
  %s10 = sld [smem:[#allocation0]]
  $region50: #{tpu_custom_call.1} parent=0
    _
  %s12 = ssub.s32 1, %s10
  %s13 = scalar_select 0, %s12, %s10
  $region1: #{tpu_custom_call.1} parent=0
    #allocation2 [shape = 'u8[4096]{0}', space=vmem, size = 0x1000, scoped, tag = 'input window, operand 0, single buffered']
    #allocation3 [shape = 's32[1]{0}', space=sflag, size = 0x4, scoped, tag = 'scoped memory for tpu_custom_call.1']
    #allocation4 [shape = 's32[1]{0}', space=sflag, size = 0x4, scoped, tag = 'scoped memory for tpu_custom_call.1']
    #allocation5 [shape = 'u8[4096]{0}', space=vmem, size = 0x1000, scoped, tag = 'output window, operand 0, single buffered']
    %14 = vsyncpa [#allocation3], 0
    %15 = vsyncpa [#allocation4], 0
    // Predicated region
    $region2: #{tpu_custom_call.1} parent=1 // pred_check
      _
    $region3: #{tpu_custom_call.1} parent=1 // pred_check_branch
      %17 = sbr.rel (0) target = $region5
    $region4: #{tpu_custom_call.1} parent=1 // pred_region
      %s19 = ssub.s32 128, 128
      %20 = vsyncadd [#allocation3], %s19
      %s22 = sshll.u32 [#allocation2], 4
      %s23 = int_to_ptr.vmem [resolvable:$true] %s22
      %25 = dma.hbm_to_vmem [thread:$0]  %s0, 128, %s23, [#allocation3]
    $region5: #{tpu_custom_call.1} parent=1 // pred_fallthru
      _
    // Predicated region
    $region6: #{tpu_custom_call.1} parent=1 // pred_check
      _
    $region7: #{tpu_custom_call.1} parent=1 // pred_check_branch
      %27 = sbr.rel (0) target = $region9
    $region8: #{tpu_custom_call.1} parent=1 // pred_region
      _
    $region9: #{tpu_custom_call.1} parent=1 // pred_fallthru
      _
    // Predicated region
    $region10: #{tpu_custom_call.1} parent=1 // pred_check
      _
    $region11: #{tpu_custom_call.1} parent=1 // pred_check_branch
      %29 = sbr.rel (0) target = $region13
    $region12: #{tpu_custom_call.1} parent=1 // pred_region
      _
    $region13: #{tpu_custom_call.1} parent=1 // pred_fallthru
      _
    // Predicated region
    $region14: #{tpu_custom_call.1} parent=1 // pred_check
      _
    $region15: #{tpu_custom_call.1} parent=1 // pred_check_branch
      %31 = sbr.rel (0) target = $region17
    $region16: #{tpu_custom_call.1} parent=1 // pred_region
      _
    $region17: #{tpu_custom_call.1} parent=1 // pred_fallthru
      _
    // Predicated region
    $region18: #{tpu_custom_call.1} parent=1 // pred_check
      _
    $region19: #{tpu_custom_call.1} parent=1 // pred_check_branch
      %33 = sbr.rel (0) target = $region21
    $region20: #{tpu_custom_call.1} parent=1 // pred_region
      _
    $region21: #{tpu_custom_call.1} parent=1 // pred_fallthru
      _
    // Predicated region
    $region22: #{tpu_custom_call.1} parent=1 // pred_check
      _
    $region23: #{tpu_custom_call.1} parent=1 // pred_check_branch
      %35 = sbr.rel (0) target = $region25
    $region24: #{tpu_custom_call.1} parent=1 // pred_region
      _
    $region25: #{tpu_custom_call.1} parent=1 // pred_fallthru
      _
    // Predicated region
    $region26: #{tpu_custom_call.1} parent=1 // pred_check
      _
    $region27: #{tpu_custom_call.1} parent=1 // pred_check_branch
      %37 = sbr.rel (0) target = $region29
    $region28: #{tpu_custom_call.1} parent=1 // pred_region
      _
    $region29: #{tpu_custom_call.1} parent=1 // pred_fallthru
      _
    // Predicated region
    $region30: #{tpu_custom_call.1} parent=1 // pred_check
      _
    $region31: #{tpu_custom_call.1} parent=1 // pred_check_branch
      %39 = sbr.rel (0) target = $region33
    $region32: #{tpu_custom_call.1} parent=1 // pred_region
      _
    $region33: #{tpu_custom_call.1} parent=1 // pred_fallthru
      _
    // Predicated region
    $region34: #{tpu_custom_call.1} parent=1 // pred_check
      _
    $region35: #{tpu_custom_call.1} parent=1 // pred_check_branch
      %41 = sbr.rel (0) target = $region37
    $region36: #{tpu_custom_call.1} parent=1 // pred_region
      _
    $region37: #{tpu_custom_call.1} parent=1 // pred_fallthru
      _
    // Predicated region
    $region38: #{tpu_custom_call.1} parent=1 // pred_check
      _
    $region39: #{tpu_custom_call.1} parent=1 // pred_check_branch
      %43 = sbr.rel (0) target = $region41
    $region40: #{tpu_custom_call.1} parent=1 // pred_region
      %44 = dma.done [#allocation3], 128
    $region41: #{tpu_custom_call.1} parent=1 // pred_fallthru
      _
    %v45 = vld [vmem:[#allocation2] sm:$0xff]
    %v46 = vld [vmem:[%s1] sm:$0xff]
    %v47 = vld [vmem:[%s1 + $0x8] sm:$0xff]
    %v48 = vld [vmem:[%s1 + $0x10] sm:$0xff]
    %v49 = vld [vmem:[%s1 + $0x18] sm:$0xff]
    %vm50 = vcmask 261120
    %v52 = vsel %vm50, %v45, 0
    %54 = vmatprep.subr.mxu0 0.0
    %55 = vmatpush1.msra.mxu0 %v46
    %56 = vmatprep.subr.mxu0 0.0
    %57 = vmatpush1.msra.mxu0 %v47
    %58 = vmatprep.subr.mxu0 0.0
    %59 = vmatpush1.msra.mxu0 %v48
    %60 = vmatprep.subr.mxu0 0.0
    %61 = vmatpush1.msra.mxu0 %v49
    %62 = vmatprep.subr.mxu0 0.0
    %63 = vmatpush1.msra.mxu0 0.0
    %64 = vmatprep.subr.mxu0 0.0
    %65 = vmatpush1.msra.mxu0 0.0
    %66 = vmatprep.subr.mxu0 0.0
    %67 = vmatpush1.msra.mxu0 0.0
    %68 = vmatprep.subr.mxu0 0.0
    %69 = vmatpush1.msra.mxu0 0.0
    %70 = vmatprep.subr.mxu0 0.0
    %71 = vmatpush1.msra.mxu0 0.0
    %72 = vmatprep.subr.mxu0 0.0
    %73 = vmatpush1.msra.mxu0 0.0
    %74 = vmatprep.subr.mxu0 0.0
    %75 = vmatpush1.msra.mxu0 0.0
    %76 = vmatprep.subr.mxu0 0.0
    %77 = vmatpush1.msra.mxu0 0.0
    %78 = vmatprep.subr.mxu0 0.0
    %79 = vmatpush1.msra.mxu0 0.0
    %80 = vmatprep.subr.mxu0 0.0
    %81 = vmatpush1.msra.mxu0 0.0
    %82 = vmatprep.subr.mxu0 0.0
    %83 = vmatpush1.msra.mxu0 0.0
    %84 = vmatprep.subr.mxu0 0.0
    %85 = vmatpush1.msra.mxu0 0.0
    %86 = vmatprep.subr.mxu0 0.0
    %87 = vmatpush1.msra.mxu0 0.0
    %88 = vmatprep.subr.mxu0 0.0
    %89 = vmatpush1.msra.mxu0 0.0
    %90 = vmatprep.subr.mxu0 0.0
    %91 = vmatpush1.msra.mxu0 0.0
    %92 = vmatprep.subr.mxu0 0.0
    %93 = vmatpush1.msra.mxu0 0.0
    %94 = vmatprep.subr.mxu0 0.0
    %95 = vmatpush1.msra.mxu0 0.0
    %96 = vmatprep.subr.mxu0 0.0
    %97 = vmatpush1.msra.mxu0 0.0
    %98 = vmatprep.subr.mxu0 0.0
    %99 = vmatpush1.msra.mxu0 0.0
    %100 = vmatprep.subr.mxu0 0.0
    %101 = vmatpush1.msra.mxu0 0.0
    %102 = vmatprep.subr.mxu0 0.0
    %103 = vmatpush1.msra.mxu0 0.0
    %104 = vmatprep.subr.mxu0 0.0
    %105 = vmatpush1.msra.mxu0 0.0
    %106 = vmatprep.subr.mxu0 0.0
    %107 = vmatpush1.msra.mxu0 0.0
    %108 = vmatprep.subr.mxu0 0.0
    %109 = vmatpush1.msra.mxu0 0.0
    %110 = vmatprep.subr.mxu0 0.0
    %111 = vmatpush1.msra.mxu0 0.0
    %112 = vmatprep.subr.mxu0 0.0
    %113 = vmatpush1.msra.mxu0 0.0
    %114 = vmatprep.subr.mxu0 0.0
    %115 = vmatpush1.msra.mxu0 0.0
    %116 = vmatprep.subr.mxu0 0.0
    %117 = vmatpush1.msra.mxu0 0.0
    %118 = vmatprep.mubr.f32.mxu0 0.0
    %119 = vmatmul.mubr.f32.gmra.mrb[0].mxu0 %v52
    %v120 = vpop.f32.mrb[0].mxu0
    %v121 = vadd.f32 0.0, %v120
    %v122 = vpop.f32.mrb[0].mxu0
    %123 = vdwg.mxu0
    %v124 = vld [vmem:[%s2] sm:$0xff]
    %v125 = vld [vmem:[%s2 + $0x8] sm:$0xff]
    %v126 = vld [vmem:[%s2 + $0x10] sm:$0xff]
    %v127 = vld [vmem:[%s2 + $0x18] sm:$0xff]
    %128 = vmatprep.subr.mxu0 0.0
    %129 = vmatpush1.msra.mxu0 %v124
    %130 = vmatprep.subr.mxu0 0.0
    %131 = vmatpush1.msra.mxu0 %v125
    %132 = vmatprep.subr.mxu0 0.0
    %133 = vmatpush1.msra.mxu0 %v126
    %134 = vmatprep.subr.mxu0 0.0
    %135 = vmatpush1.msra.mxu0 %v127
    %136 = vmatprep.subr.mxu0 0.0
    %137 = vmatpush1.msra.mxu0 0.0
    %138 = vmatprep.subr.mxu0 0.0
    %139 = vmatpush1.msra.mxu0 0.0
    %140 = vmatprep.subr.mxu0 0.0
    %141 = vmatpush1.msra.mxu0 0.0
    %142 = vmatprep.subr.mxu0 0.0
    %143 = vmatpush1.msra.mxu0 0.0
    %144 = vmatprep.subr.mxu0 0.0
    %145 = vmatpush1.msra.mxu0 0.0
    %146 = vmatprep.subr.mxu0 0.0
    %147 = vmatpush1.msra.mxu0 0.0
    %148 = vmatprep.subr.mxu0 0.0
    %149 = vmatpush1.msra.mxu0 0.0
    %150 = vmatprep.subr.mxu0 0.0
    %151 = vmatpush1.msra.mxu0 0.0
    %152 = vmatprep.subr.mxu0 0.0
    %153 = vmatpush1.msra.mxu0 0.0
    %154 = vmatprep.subr.mxu0 0.0
    %155 = vmatpush1.msra.mxu0 0.0
    %156 = vmatprep.subr.mxu0 0.0
    %157 = vmatpush1.msra.mxu0 0.0
    %158 = vmatprep.subr.mxu0 0.0
    %159 = vmatpush1.msra.mxu0 0.0
    %160 = vmatprep.subr.mxu0 0.0
    %161 = vmatpush1.msra.mxu0 0.0
    %162 = vmatprep.subr.mxu0 0.0
    %163 = vmatpush1.msra.mxu0 0.0
    %164 = vmatprep.subr.mxu0 0.0
    %165 = vmatpush1.msra.mxu0 0.0
    %166 = vmatprep.subr.mxu0 0.0
    %167 = vmatpush1.msra.mxu0 0.0
    %168 = vmatprep.subr.mxu0 0.0
    %169 = vmatpush1.msra.mxu0 0.0
    %170 = vmatprep.subr.mxu0 0.0
    %171 = vmatpush1.msra.mxu0 0.0
    %172 = vmatprep.subr.mxu0 0.0
    %173 = vmatpush1.msra.mxu0 0.0
    %174 = vmatprep.subr.mxu0 0.0
    %175 = vmatpush1.msra.mxu0 0.0
    %176 = vmatprep.subr.mxu0 0.0
    %177 = vmatpush1.msra.mxu0 0.0
    %178 = vmatprep.subr.mxu0 0.0
    %179 = vmatpush1.msra.mxu0 0.0
    %180 = vmatprep.subr.mxu0 0.0
    %181 = vmatpush1.msra.mxu0 0.0
    %182 = vmatprep.subr.mxu0 0.0
    %183 = vmatpush1.msra.mxu0 0.0
    %184 = vmatprep.subr.mxu0 0.0
    %185 = vmatpush1.msra.mxu0 0.0
    %186 = vmatprep.subr.mxu0 0.0
    %187 = vmatpush1.msra.mxu0 0.0
    %188 = vmatprep.subr.mxu0 0.0
    %189 = vmatpush1.msra.mxu0 0.0
    %190 = vmatprep.subr.mxu0 0.0
    %191 = vmatpush1.msra.mxu0 0.0
    %192 = vmatprep.mubr.f32.mxu0 0.0
    %193 = vmatmul.mubr.f32.gmra.mrb[0].mxu0 %v52
    %v194 = vpop.f32.mrb[0].mxu0
    %v195 = vadd.f32 0.0, %v194
    %v196 = vpop.f32.mrb[0].mxu0
    %197 = vdwg.mxu0
    %v198 = vld [vmem:[%s3] sm:$0xff]
    %v199 = vld [vmem:[%s3 + $0x8] sm:$0xff]
    %v200 = vld [vmem:[%s3 + $0x10] sm:$0xff]
    %v201 = vld [vmem:[%s3 + $0x18] sm:$0xff]
    %v202 = vld [vmem:[%s3 + $0x20] sm:$0xff]
    %v203 = vld [vmem:[%s3 + $0x28] sm:$0xff]
    %v204 = vld [vmem:[%s3 + $0x30] sm:$0xff]
    %v205 = vld [vmem:[%s3 + $0x38] sm:$0xff]
    %v206 = vld [vmem:[%s4] sm:$0xf]
    %v207 = vld [vmem:[%s5] sm:$0x1]
    %v208 = vld [vmem:[%s7] sm:$0x1]
    %vm209 = vcmask 64512
    %v211 = vsel %vm209, 1.0, 0
    %213 = vmatprep.subr.mxu0 0.0
    %214 = vmatpush1.msra.mxu0 %v121
    %215 = vmatprep.subr.mxu0 0.0
    %216 = vmatpush1.msra.mxu0 0.0
    %217 = vmatprep.subr.mxu0 0.0
    %218 = vmatpush1.msra.mxu0 0.0
    %219 = vmatprep.subr.mxu0 0.0
    %220 = vmatpush1.msra.mxu0 0.0
    %221 = vmatprep.subr.mxu0 0.0
    %222 = vmatpush1.msra.mxu0 0.0
    %223 = vmatprep.subr.mxu0 0.0
    %224 = vmatpush1.msra.mxu0 0.0
    %225 = vmatprep.subr.mxu0 0.0
    %226 = vmatpush1.msra.mxu0 0.0
    %227 = vmatprep.subr.mxu0 0.0
    %228 = vmatpush1.msra.mxu0 0.0
    %229 = vmatprep.subr.mxu0 0.0
    %230 = vmatpush1.msra.mxu0 0.0
    %231 = vmatprep.subr.mxu0 0.0
    %232 = vmatpush1.msra.mxu0 0.0
    %233 = vmatprep.subr.mxu0 0.0
    %234 = vmatpush1.msra.mxu0 0.0
    %235 = vmatprep.subr.mxu0 0.0
    %236 = vmatpush1.msra.mxu0 0.0
    %237 = vmatprep.subr.mxu0 0.0
    %238 = vmatpush1.msra.mxu0 0.0
    %239 = vmatprep.subr.mxu0 0.0
    %240 = vmatpush1.msra.mxu0 0.0
    %241 = vmatprep.subr.mxu0 0.0
    %242 = vmatpush1.msra.mxu0 0.0
    %243 = vmatprep.subr.mxu0 0.0
    %244 = vmatpush1.msra.mxu0 0.0
    %245 = vmatprep.subr.mxu0 0.0
    %246 = vmatpush1.msra.mxu0 0.0
    %247 = vmatprep.subr.mxu0 0.0
    %248 = vmatpush1.msra.mxu0 0.0
    %249 = vmatprep.subr.mxu0 0.0
    %250 = vmatpush1.msra.mxu0 0.0
    %251 = vmatprep.subr.mxu0 0.0
    %252 = vmatpush1.msra.mxu0 0.0
    %253 = vmatprep.subr.mxu0 0.0
    %254 = vmatpush1.msra.mxu0 0.0
    %255 = vmatprep.subr.mxu0 0.0
    %256 = vmatpush1.msra.mxu0 0.0
    %257 = vmatprep.subr.mxu0 0.0
    %258 = vmatpush1.msra.mxu0 0.0
    %259 = vmatprep.subr.mxu0 0.0
    %260 = vmatpush1.msra.mxu0 0.0
    %261 = vmatprep.subr.mxu0 0.0
    %262 = vmatpush1.msra.mxu0 0.0
    %263 = vmatprep.subr.mxu0 0.0
    %264 = vmatpush1.msra.mxu0 0.0
    %265 = vmatprep.subr.mxu0 0.0
    %266 = vmatpush1.msra.mxu0 0.0
    %267 = vmatprep.subr.mxu0 0.0
    %268 = vmatpush1.msra.mxu0 0.0
    %269 = vmatprep.subr.mxu0 0.0
    %270 = vmatpush1.msra.mxu0 0.0
    %271 = vmatprep.subr.mxu0 0.0
    %272 = vmatpush1.msra.mxu0 0.0
    %273 = vmatprep.subr.mxu0 0.0
    %274 = vmatpush1.msra.mxu0 0.0
    %275 = vmatprep.subr.mxu0 0.0
    %276 = vmatpush1.msra.mxu0 0.0
    %277 = vmatprep.mubr.f32.mxu0 0.0
    %278 = vmatmul.mubr.f32.gmra.mrb[0].mxu0 %v211
    %v279 = vpop.f32.mrb[0].mxu0
    %v280 = vadd.f32 0.0, %v279
    %v281 = vpop.f32.mrb[0].mxu0
    %282 = vdwg.mxu0
    %v283 = vmul.f32 %v121, %v121
    %284 = vmatprep.subr.mxu0 0.0
    %285 = vmatpush1.msra.mxu0 %v283
    %286 = vmatprep.subr.mxu0 0.0
    %287 = vmatpush1.msra.mxu0 0.0
    %288 = vmatprep.subr.mxu0 0.0
    %289 = vmatpush1.msra.mxu0 0.0
    %290 = vmatprep.subr.mxu0 0.0
    %291 = vmatpush1.msra.mxu0 0.0
    %292 = vmatprep.subr.mxu0 0.0
    %293 = vmatpush1.msra.mxu0 0.0
    %294 = vmatprep.subr.mxu0 0.0
    %295 = vmatpush1.msra.mxu0 0.0
    %296 = vmatprep.subr.mxu0 0.0
    %297 = vmatpush1.msra.mxu0 0.0
    %298 = vmatprep.subr.mxu0 0.0
    %299 = vmatpush1.msra.mxu0 0.0
    %300 = vmatprep.subr.mxu0 0.0
    %301 = vmatpush1.msra.mxu0 0.0
    %302 = vmatprep.subr.mxu0 0.0
    %303 = vmatpush1.msra.mxu0 0.0
    %304 = vmatprep.subr.mxu0 0.0
    %305 = vmatpush1.msra.mxu0 0.0
    %306 = vmatprep.subr.mxu0 0.0
    %307 = vmatpush1.msra.mxu0 0.0
    %308 = vmatprep.subr.mxu0 0.0
    %309 = vmatpush1.msra.mxu0 0.0
    %310 = vmatprep.subr.mxu0 0.0
    %311 = vmatpush1.msra.mxu0 0.0
    %312 = vmatprep.subr.mxu0 0.0
    %313 = vmatpush1.msra.mxu0 0.0
    %314 = vmatprep.subr.mxu0 0.0
    %315 = vmatpush1.msra.mxu0 0.0
    %316 = vmatprep.subr.mxu0 0.0
    %317 = vmatpush1.msra.mxu0 0.0
    %318 = vmatprep.subr.mxu0 0.0
    %319 = vmatpush1.msra.mxu0 0.0
    %320 = vmatprep.subr.mxu0 0.0
    %321 = vmatpush1.msra.mxu0 0.0
    %322 = vmatprep.subr.mxu0 0.0
    %323 = vmatpush1.msra.mxu0 0.0
    %324 = vmatprep.subr.mxu0 0.0
    %325 = vmatpush1.msra.mxu0 0.0
    %326 = vmatprep.subr.mxu0 0.0
    %327 = vmatpush1.msra.mxu0 0.0
    %328 = vmatprep.subr.mxu0 0.0
    %329 = vmatpush1.msra.mxu0 0.0
    %330 = vmatprep.subr.mxu0 0.0
    %331 = vmatpush1.msra.mxu0 0.0
    %332 = vmatprep.subr.mxu0 0.0
    %333 = vmatpush1.msra.mxu0 0.0
    %334 = vmatprep.subr.mxu0 0.0
    %335 = vmatpush1.msra.mxu0 0.0
    %336 = vmatprep.subr.mxu0 0.0
    %337 = vmatpush1.msra.mxu0 0.0
    %338 = vmatprep.subr.mxu0 0.0
    %339 = vmatpush1.msra.mxu0 0.0
    %340 = vmatprep.subr.mxu0 0.0
    %341 = vmatpush1.msra.mxu0 0.0
    %342 = vmatprep.subr.mxu0 0.0
    %343 = vmatpush1.msra.mxu0 0.0
    %344 = vmatprep.subr.mxu0 0.0
    %345 = vmatpush1.msra.mxu0 0.0
    %346 = vmatprep.subr.mxu0 0.0
    %347 = vmatpush1.msra.mxu0 0.0
    %348 = vmatprep.mubr.f32.mxu0 0.0
    %349 = vmatmul.mubr.f32.gmra.mrb[0].mxu0 %v211
    %v350 = vpop.f32.mrb[0].mxu0
    %v351 = vadd.f32 0.0, %v350
    %v352 = vpop.f32.mrb[0].mxu0
    %353 = vdwg.mxu0
    %vm354 = vcmask 523264
    %v356 = vsel %vm354, %v280, 0
    %358 = vmatprep.subr.mxu0 0.0
    %359 = vmatpush1.msra.mxu0 %v198
    %360 = vmatprep.subr.mxu0 0.0
    %361 = vmatpush1.msra.mxu0 %v199
    %362 = vmatprep.subr.mxu0 0.0
    %363 = vmatpush1.msra.mxu0 %v200
    %364 = vmatprep.subr.mxu0 0.0
    %365 = vmatpush1.msra.mxu0 %v201
    %366 = vmatprep.subr.mxu0 0.0
    %367 = vmatpush1.msra.mxu0 %v202
    %368 = vmatprep.subr.mxu0 0.0
    %369 = vmatpush1.msra.mxu0 %v203
    %370 = vmatprep.subr.mxu0 0.0
    %371 = vmatpush1.msra.mxu0 %v204
    %372 = vmatprep.subr.mxu0 0.0
    %373 = vmatpush1.msra.mxu0 %v205
    %374 = vmatprep.subr.mxu0 0.0
    %375 = vmatpush1.msra.mxu0 0.0
    %376 = vmatprep.subr.mxu0 0.0
    %377 = vmatpush1.msra.mxu0 0.0
    %378 = vmatprep.subr.mxu0 0.0
    %379 = vmatpush1.msra.mxu0 0.0
    %380 = vmatprep.subr.mxu0 0.0
    %381 = vmatpush1.msra.mxu0 0.0
    %382 = vmatprep.subr.mxu0 0.0
    %383 = vmatpush1.msra.mxu0 0.0
    %384 = vmatprep.subr.mxu0 0.0
    %385 = vmatpush1.msra.mxu0 0.0
    %386 = vmatprep.subr.mxu0 0.0
    %387 = vmatpush1.msra.mxu0 0.0
    %388 = vmatprep.subr.mxu0 0.0
    %389 = vmatpush1.msra.mxu0 0.0
    %390 = vmatprep.subr.mxu0 0.0
    %391 = vmatpush1.msra.mxu0 0.0
    %392 = vmatprep.subr.mxu0 0.0
    %393 = vmatpush1.msra.mxu0 0.0
    %394 = vmatprep.subr.mxu0 0.0
    %395 = vmatpush1.msra.mxu0 0.0
    %396 = vmatprep.subr.mxu0 0.0
    %397 = vmatpush1.msra.mxu0 0.0
    %398 = vmatprep.subr.mxu0 0.0
    %399 = vmatpush1.msra.mxu0 0.0
    %400 = vmatprep.subr.mxu0 0.0
    %401 = vmatpush1.msra.mxu0 0.0
    %402 = vmatprep.subr.mxu0 0.0
    %403 = vmatpush1.msra.mxu0 0.0
    %404 = vmatprep.subr.mxu0 0.0
    %405 = vmatpush1.msra.mxu0 0.0
    %406 = vmatprep.subr.mxu0 0.0
    %407 = vmatpush1.msra.mxu0 0.0
    %408 = vmatprep.subr.mxu0 0.0
    %409 = vmatpush1.msra.mxu0 0.0
    %410 = vmatprep.subr.mxu0 0.0
    %411 = vmatpush1.msra.mxu0 0.0
    %412 = vmatprep.subr.mxu0 0.0
    %413 = vmatpush1.msra.mxu0 0.0
    %414 = vmatprep.subr.mxu0 0.0
    %415 = vmatpush1.msra.mxu0 0.0
    %416 = vmatprep.subr.mxu0 0.0
    %417 = vmatpush1.msra.mxu0 0.0
    %418 = vmatprep.subr.mxu0 0.0
    %419 = vmatpush1.msra.mxu0 0.0
    %420 = vmatprep.subr.mxu0 0.0
    %421 = vmatpush1.msra.mxu0 0.0
    %422 = vmatprep.mubr.f32.mxu0 0.0
    %423 = vmatmul.mubr.f32.gmra.mrb[0].mxu0 %v356
    %v424 = vpop.f32.mrb[0].mxu0
    %v425 = vadd.f32 0.0, %v424
    %v426 = vpop.f32.mrb[0].mxu0
    %427 = vdwg.mxu0
    %v428 = vmul.f32 %v425, 0.03125
    %v430 = vsel %vm354, %v351, 0
    %432 = vmatprep.subr.mxu0 0.0
    %433 = vmatpush1.msra.mxu0 %v198
    %434 = vmatprep.subr.mxu0 0.0
    %435 = vmatpush1.msra.mxu0 %v199
    %436 = vmatprep.subr.mxu0 0.0
    %437 = vmatpush1.msra.mxu0 %v200
    %438 = vmatprep.subr.mxu0 0.0
    %439 = vmatpush1.msra.mxu0 %v201
    %440 = vmatprep.subr.mxu0 0.0
    %441 = vmatpush1.msra.mxu0 %v202
    %442 = vmatprep.subr.mxu0 0.0
    %443 = vmatpush1.msra.mxu0 %v203
    %444 = vmatprep.subr.mxu0 0.0
    %445 = vmatpush1.msra.mxu0 %v204
    %446 = vmatprep.subr.mxu0 0.0
    %447 = vmatpush1.msra.mxu0 %v205
    %448 = vmatprep.subr.mxu0 0.0
    %449 = vmatpush1.msra.mxu0 0.0
    %450 = vmatprep.subr.mxu0 0.0
    %451 = vmatpush1.msra.mxu0 0.0
    %452 = vmatprep.subr.mxu0 0.0
    %453 = vmatpush1.msra.mxu0 0.0
    %454 = vmatprep.subr.mxu0 0.0
    %455 = vmatpush1.msra.mxu0 0.0
    %456 = vmatprep.subr.mxu0 0.0
    %457 = vmatpush1.msra.mxu0 0.0
    %458 = vmatprep.subr.mxu0 0.0
    %459 = vmatpush1.msra.mxu0 0.0
    %460 = vmatprep.subr.mxu0 0.0
    %461 = vmatpush1.msra.mxu0 0.0
    %462 = vmatprep.subr.mxu0 0.0
    %463 = vmatpush1.msra.mxu0 0.0
    %464 = vmatprep.subr.mxu0 0.0
    %465 = vmatpush1.msra.mxu0 0.0
    %466 = vmatprep.subr.mxu0 0.0
    %467 = vmatpush1.msra.mxu0 0.0
    %468 = vmatprep.subr.mxu0 0.0
    %469 = vmatpush1.msra.mxu0 0.0
    %470 = vmatprep.subr.mxu0 0.0
    %471 = vmatpush1.msra.mxu0 0.0
    %472 = vmatprep.subr.mxu0 0.0
    %473 = vmatpush1.msra.mxu0 0.0
    %474 = vmatprep.subr.mxu0 0.0
    %475 = vmatpush1.msra.mxu0 0.0
    %476 = vmatprep.subr.mxu0 0.0
    %477 = vmatpush1.msra.mxu0 0.0
    %478 = vmatprep.subr.mxu0 0.0
    %479 = vmatpush1.msra.mxu0 0.0
    %480 = vmatprep.subr.mxu0 0.0
    %481 = vmatpush1.msra.mxu0 0.0
    %482 = vmatprep.subr.mxu0 0.0
    %483 = vmatpush1.msra.mxu0 0.0
    %484 = vmatprep.subr.mxu0 0.0
    %485 = vmatpush1.msra.mxu0 0.0
    %486 = vmatprep.subr.mxu0 0.0
    %487 = vmatpush1.msra.mxu0 0.0
    %488 = vmatprep.subr.mxu0 0.0
    %489 = vmatpush1.msra.mxu0 0.0
    %490 = vmatprep.subr.mxu0 0.0
    %491 = vmatpush1.msra.mxu0 0.0
    %492 = vmatprep.subr.mxu0 0.0
    %493 = vmatpush1.msra.mxu0 0.0
    %494 = vmatprep.subr.mxu0 0.0
    %495 = vmatpush1.msra.mxu0 0.0
    %496 = vmatprep.mubr.f32.mxu0 0.0
    %497 = vmatmul.mubr.f32.gmra.mrb[0].mxu0 %v430
    %v498 = vpop.f32.mrb[0].mxu0
    %v499 = vadd.f32 0.0, %v498
    %v500 = vpop.f32.mrb[0].mxu0
    %501 = vdwg.mxu0
    %v502 = vmul.f32 %v499, 0.03125
    %v503 = vmul.f32 %v428, %v428
    %v504 = vsub.f32 %v502, %v503
    %v505 = vadd.f32 %v504, 1e-05
    %v506 = vrsqrt.pop %v505
    %vm507 = vcmask 31744
    %v509 = vsel %vm507, %v428, 0
    %vm511 = vcmask 1043456
    %v513 = vsel %vm511, %v206, 0
    %515 = vmatprep.subr.mxu0 0.0
    %516 = vmatpush1.msra.mxu0 %v513
    %517 = vmatprep.subr.mxu0 0.0
    %518 = vmatpush1.msra.mxu0 0.0
    %519 = vmatprep.subr.mxu0 0.0
    %520 = vmatpush1.msra.mxu0 0.0
    %521 = vmatprep.subr.mxu0 0.0
    %522 = vmatpush1.msra.mxu0 0.0
    %523 = vmatprep.subr.mxu0 0.0
    %524 = vmatpush1.msra.mxu0 0.0
    %525 = vmatprep.subr.mxu0 0.0
    %526 = vmatpush1.msra.mxu0 0.0
    %527 = vmatprep.subr.mxu0 0.0
    %528 = vmatpush1.msra.mxu0 0.0
    %529 = vmatprep.subr.mxu0 0.0
    %530 = vmatpush1.msra.mxu0 0.0
    %531 = vmatprep.subr.mxu0 0.0
    %532 = vmatpush1.msra.mxu0 0.0
    %533 = vmatprep.subr.mxu0 0.0
    %534 = vmatpush1.msra.mxu0 0.0
    %535 = vmatprep.subr.mxu0 0.0
    %536 = vmatpush1.msra.mxu0 0.0
    %537 = vmatprep.subr.mxu0 0.0
    %538 = vmatpush1.msra.mxu0 0.0
    %539 = vmatprep.subr.mxu0 0.0
    %540 = vmatpush1.msra.mxu0 0.0
    %541 = vmatprep.subr.mxu0 0.0
    %542 = vmatpush1.msra.mxu0 0.0
    %543 = vmatprep.subr.mxu0 0.0
    %544 = vmatpush1.msra.mxu0 0.0
    %545 = vmatprep.subr.mxu0 0.0
    %546 = vmatpush1.msra.mxu0 0.0
    %547 = vmatprep.subr.mxu0 0.0
    %548 = vmatpush1.msra.mxu0 0.0
    %549 = vmatprep.subr.mxu0 0.0
    %550 = vmatpush1.msra.mxu0 0.0
    %551 = vmatprep.subr.mxu0 0.0
    %552 = vmatpush1.msra.mxu0 0.0
    %553 = vmatprep.subr.mxu0 0.0
    %554 = vmatpush1.msra.mxu0 0.0
    %555 = vmatprep.subr.mxu0 0.0
    %556 = vmatpush1.msra.mxu0 0.0
    %557 = vmatprep.subr.mxu0 0.0
    %558 = vmatpush1.msra.mxu0 0.0
    %559 = vmatprep.subr.mxu0 0.0
    %560 = vmatpush1.msra.mxu0 0.0
    %561 = vmatprep.subr.mxu0 0.0
    %562 = vmatpush1.msra.mxu0 0.0
    %563 = vmatprep.subr.mxu0 0.0
    %564 = vmatpush1.msra.mxu0 0.0
    %565 = vmatprep.subr.mxu0 0.0
    %566 = vmatpush1.msra.mxu0 0.0
    %567 = vmatprep.subr.mxu0 0.0
    %568 = vmatpush1.msra.mxu0 0.0
    %569 = vmatprep.subr.mxu0 0.0
    %570 = vmatpush1.msra.mxu0 0.0
    %571 = vmatprep.subr.mxu0 0.0
    %572 = vmatpush1.msra.mxu0 0.0
    %573 = vmatprep.subr.mxu0 0.0
    %574 = vmatpush1.msra.mxu0 0.0
    %575 = vmatprep.subr.mxu0 0.0
    %576 = vmatpush1.msra.mxu0 0.0
    %577 = vmatprep.subr.mxu0 0.0
    %578 = vmatpush1.msra.mxu0 0.0
    %579 = vmatprep.mubr.f32.mxu0 0.0
    %580 = vmatmul.mubr.f32.gmra.mrb[0].mxu0 %v509
    %v581 = vpop.f32.mrb[0].mxu0
    %v582 = vadd.f32 0.0, %v581
    %v583 = vpop.f32.mrb[0].mxu0
    %584 = vdwg.mxu0
    %v586 = vsel %vm507, %v506, 0
    %588 = vmatprep.subr.mxu0 0.0
    %589 = vmatpush1.msra.mxu0 %v513
    %590 = vmatprep.subr.mxu0 0.0
    %591 = vmatpush1.msra.mxu0 0.0
    %592 = vmatprep.subr.mxu0 0.0
    %593 = vmatpush1.msra.mxu0 0.0
    %594 = vmatprep.subr.mxu0 0.0
    %595 = vmatpush1.msra.mxu0 0.0
    %596 = vmatprep.subr.mxu0 0.0
    %597 = vmatpush1.msra.mxu0 0.0
    %598 = vmatprep.subr.mxu0 0.0
    %599 = vmatpush1.msra.mxu0 0.0
    %600 = vmatprep.subr.mxu0 0.0
    %601 = vmatpush1.msra.mxu0 0.0
    %602 = vmatprep.subr.mxu0 0.0
    %603 = vmatpush1.msra.mxu0 0.0
    %604 = vmatprep.subr.mxu0 0.0
    %605 = vmatpush1.msra.mxu0 0.0
    %606 = vmatprep.subr.mxu0 0.0
    %607 = vmatpush1.msra.mxu0 0.0
    %608 = vmatprep.subr.mxu0 0.0
    %609 = vmatpush1.msra.mxu0 0.0
    %610 = vmatprep.subr.mxu0 0.0
    %611 = vmatpush1.msra.mxu0 0.0
    %612 = vmatprep.subr.mxu0 0.0
    %613 = vmatpush1.msra.mxu0 0.0
    %614 = vmatprep.subr.mxu0 0.0
    %615 = vmatpush1.msra.mxu0 0.0
    %616 = vmatprep.subr.mxu0 0.0
    %617 = vmatpush1.msra.mxu0 0.0
    %618 = vmatprep.subr.mxu0 0.0
    %619 = vmatpush1.msra.mxu0 0.0
    %620 = vmatprep.subr.mxu0 0.0
    %621 = vmatpush1.msra.mxu0 0.0
    %622 = vmatprep.subr.mxu0 0.0
    %623 = vmatpush1.msra.mxu0 0.0
    %624 = vmatprep.subr.mxu0 0.0
    %625 = vmatpush1.msra.mxu0 0.0
    %626 = vmatprep.subr.mxu0 0.0
    %627 = vmatpush1.msra.mxu0 0.0
    %628 = vmatprep.subr.mxu0 0.0
    %629 = vmatpush1.msra.mxu0 0.0
    %630 = vmatprep.subr.mxu0 0.0
    %631 = vmatpush1.msra.mxu0 0.0
    %632 = vmatprep.subr.mxu0 0.0
    %633 = vmatpush1.msra.mxu0 0.0
    %634 = vmatprep.subr.mxu0 0.0
    %635 = vmatpush1.msra.mxu0 0.0
    %636 = vmatprep.subr.mxu0 0.0
    %637 = vmatpush1.msra.mxu0 0.0
    %638 = vmatprep.subr.mxu0 0.0
    %639 = vmatpush1.msra.mxu0 0.0
    %640 = vmatprep.subr.mxu0 0.0
    %641 = vmatpush1.msra.mxu0 0.0
    %642 = vmatprep.subr.mxu0 0.0
    %643 = vmatpush1.msra.mxu0 0.0
    %644 = vmatprep.subr.mxu0 0.0
    %645 = vmatpush1.msra.mxu0 0.0
    %646 = vmatprep.subr.mxu0 0.0
    %647 = vmatpush1.msra.mxu0 0.0
    %648 = vmatprep.subr.mxu0 0.0
    %649 = vmatpush1.msra.mxu0 0.0
    %650 = vmatprep.subr.mxu0 0.0
    %651 = vmatpush1.msra.mxu0 0.0
    %652 = vmatprep.mubr.f32.mxu0 0.0
    %653 = vmatmul.mubr.f32.gmra.mrb[0].mxu0 %v586
    %v654 = vpop.f32.mrb[0].mxu0
    %v655 = vadd.f32 0.0, %v654
    %v656 = vpop.f32.mrb[0].mxu0
    %657 = vdwg.mxu0
    %v658 = vmul.f32 %v655, %v207
    %v659 = vmul.f32 %v582, %v658
    %v660 = vsub.f32 %v208, %v659
    %v661 = vlaneseq
    %v662 = vshrl.u32 %v661, 7
    %v663 = vsub.s32 0, %v662
    %v664 = vrot.slane %v658, %v663
    %v665 = vmul.f32 %v121, %v664
    %v667 = vlaneseq
    %v668 = vshrl.u32 %v667, 7
    %v669 = vsub.s32 0, %v668
    %v670 = vrot.slane %v660, %v669
    %v672 = vadd.f32 %v665, %v670
    %v673 = vld [vmem:[%s6] sm:$0x1]
    %v674 = vld [vmem:[%s8] sm:$0x1]
    %675 = vmatprep.subr.mxu0 0.0
    %676 = vmatpush1.msra.mxu0 %v195
    %677 = vmatprep.subr.mxu0 0.0
    %678 = vmatpush1.msra.mxu0 0.0
    %679 = vmatprep.subr.mxu0 0.0
    %680 = vmatpush1.msra.mxu0 0.0
    %681 = vmatprep.subr.mxu0 0.0
    %682 = vmatpush1.msra.mxu0 0.0
    %683 = vmatprep.subr.mxu0 0.0
    %684 = vmatpush1.msra.mxu0 0.0
    %685 = vmatprep.subr.mxu0 0.0
    %686 = vmatpush1.msra.mxu0 0.0
    %687 = vmatprep.subr.mxu0 0.0
    %688 = vmatpush1.msra.mxu0 0.0
    %689 = vmatprep.subr.mxu0 0.0
    %690 = vmatpush1.msra.mxu0 0.0
    %691 = vmatprep.subr.mxu0 0.0
    %692 = vmatpush1.msra.mxu0 0.0
    %693 = vmatprep.subr.mxu0 0.0
    %694 = vmatpush1.msra.mxu0 0.0
    %695 = vmatprep.subr.mxu0 0.0
    %696 = vmatpush1.msra.mxu0 0.0
    %697 = vmatprep.subr.mxu0 0.0
    %698 = vmatpush1.msra.mxu0 0.0
    %699 = vmatprep.subr.mxu0 0.0
    %700 = vmatpush1.msra.mxu0 0.0
    %701 = vmatprep.subr.mxu0 0.0
    %702 = vmatpush1.msra.mxu0 0.0
    %703 = vmatprep.subr.mxu0 0.0
    %704 = vmatpush1.msra.mxu0 0.0
    %705 = vmatprep.subr.mxu0 0.0
    %706 = vmatpush1.msra.mxu0 0.0
    %707 = vmatprep.subr.mxu0 0.0
    %708 = vmatpush1.msra.mxu0 0.0
    %709 = vmatprep.subr.mxu0 0.0
    %710 = vmatpush1.msra.mxu0 0.0
    %711 = vmatprep.subr.mxu0 0.0
    %712 = vmatpush1.msra.mxu0 0.0
    %713 = vmatprep.subr.mxu0 0.0
    %714 = vmatpush1.msra.mxu0 0.0
    %715 = vmatprep.subr.mxu0 0.0
    %716 = vmatpush1.msra.mxu0 0.0
    %717 = vmatprep.subr.mxu0 0.0
    %718 = vmatpush1.msra.mxu0 0.0
    %719 = vmatprep.subr.mxu0 0.0
    %720 = vmatpush1.msra.mxu0 0.0
    %721 = vmatprep.subr.mxu0 0.0
    %722 = vmatpush1.msra.mxu0 0.0
    %723 = vmatprep.subr.mxu0 0.0
    %724 = vmatpush1.msra.mxu0 0.0
    %725 = vmatprep.subr.mxu0 0.0
    %726 = vmatpush1.msra.mxu0 0.0
    %727 = vmatprep.subr.mxu0 0.0
    %728 = vmatpush1.msra.mxu0 0.0
    %729 = vmatprep.subr.mxu0 0.0
    %730 = vmatpush1.msra.mxu0 0.0
    %731 = vmatprep.subr.mxu0 0.0
    %732 = vmatpush1.msra.mxu0 0.0
    %733 = vmatprep.subr.mxu0 0.0
    %734 = vmatpush1.msra.mxu0 0.0
    %735 = vmatprep.subr.mxu0 0.0
    %736 = vmatpush1.msra.mxu0 0.0
    %737 = vmatprep.subr.mxu0 0.0
    %738 = vmatpush1.msra.mxu0 0.0
    %739 = vmatprep.mubr.f32.mxu0 0.0
    %740 = vmatmul.mubr.f32.gmra.mrb[0].mxu0 %v211
    %v741 = vpop.f32.mrb[0].mxu0
    %v742 = vadd.f32 0.0, %v741
    %v743 = vpop.f32.mrb[0].mxu0
    %744 = vdwg.mxu0
    %v745 = vmul.f32 %v195, %v195
    %746 = vmatprep.subr.mxu0 0.0
    %747 = vmatpush1.msra.mxu0 %v745
    %748 = vmatprep.subr.mxu0 0.0
    %749 = vmatpush1.msra.mxu0 0.0
    %750 = vmatprep.subr.mxu0 0.0
    %751 = vmatpush1.msra.mxu0 0.0
    %752 = vmatprep.subr.mxu0 0.0
    %753 = vmatpush1.msra.mxu0 0.0
    %754 = vmatprep.subr.mxu0 0.0
    %755 = vmatpush1.msra.mxu0 0.0
    %756 = vmatprep.subr.mxu0 0.0
    %757 = vmatpush1.msra.mxu0 0.0
    %758 = vmatprep.subr.mxu0 0.0
    %759 = vmatpush1.msra.mxu0 0.0
    %760 = vmatprep.subr.mxu0 0.0
    %761 = vmatpush1.msra.mxu0 0.0
    %762 = vmatprep.subr.mxu0 0.0
    %763 = vmatpush1.msra.mxu0 0.0
    %764 = vmatprep.subr.mxu0 0.0
    %765 = vmatpush1.msra.mxu0 0.0
    %766 = vmatprep.subr.mxu0 0.0
    %767 = vmatpush1.msra.mxu0 0.0
    %768 = vmatprep.subr.mxu0 0.0
    %769 = vmatpush1.msra.mxu0 0.0
    %770 = vmatprep.subr.mxu0 0.0
    %771 = vmatpush1.msra.mxu0 0.0
    %772 = vmatprep.subr.mxu0 0.0
    %773 = vmatpush1.msra.mxu0 0.0
    %774 = vmatprep.subr.mxu0 0.0
    %775 = vmatpush1.msra.mxu0 0.0
    %776 = vmatprep.subr.mxu0 0.0
    %777 = vmatpush1.msra.mxu0 0.0
    %778 = vmatprep.subr.mxu0 0.0
    %779 = vmatpush1.msra.mxu0 0.0
    %780 = vmatprep.subr.mxu0 0.0
    %781 = vmatpush1.msra.mxu0 0.0
    %782 = vmatprep.subr.mxu0 0.0
    %783 = vmatpush1.msra.mxu0 0.0
    %784 = vmatprep.subr.mxu0 0.0
    %785 = vmatpush1.msra.mxu0 0.0
    %786 = vmatprep.subr.mxu0 0.0
    %787 = vmatpush1.msra.mxu0 0.0
    %788 = vmatprep.subr.mxu0 0.0
    %789 = vmatpush1.msra.mxu0 0.0
    %790 = vmatprep.subr.mxu0 0.0
    %791 = vmatpush1.msra.mxu0 0.0
    %792 = vmatprep.subr.mxu0 0.0
    %793 = vmatpush1.msra.mxu0 0.0
    %794 = vmatprep.subr.mxu0 0.0
    %795 = vmatpush1.msra.mxu0 0.0
    %796 = vmatprep.subr.mxu0 0.0
    %797 = vmatpush1.msra.mxu0 0.0
    %798 = vmatprep.subr.mxu0 0.0
    %799 = vmatpush1.msra.mxu0 0.0
    %800 = vmatprep.subr.mxu0 0.0
    %801 = vmatpush1.msra.mxu0 0.0
    %802 = vmatprep.subr.mxu0 0.0
    %803 = vmatpush1.msra.mxu0 0.0
    %804 = vmatprep.subr.mxu0 0.0
    %805 = vmatpush1.msra.mxu0 0.0
    %806 = vmatprep.subr.mxu0 0.0
    %807 = vmatpush1.msra.mxu0 0.0
    %808 = vmatprep.subr.mxu0 0.0
    %809 = vmatpush1.msra.mxu0 0.0
    %810 = vmatprep.mubr.f32.mxu0 0.0
    %811 = vmatmul.mubr.f32.gmra.mrb[0].mxu0 %v211
    %v812 = vpop.f32.mrb[0].mxu0
    %v813 = vadd.f32 0.0, %v812
    %v814 = vpop.f32.mrb[0].mxu0
    %815 = vdwg.mxu0
    %v817 = vsel %vm354, %v742, 0
    %819 = vmatprep.subr.mxu0 0.0
    %820 = vmatpush1.msra.mxu0 %v198
    %821 = vmatprep.subr.mxu0 0.0
    %822 = vmatpush1.msra.mxu0 %v199
    %823 = vmatprep.subr.mxu0 0.0
    %824 = vmatpush1.msra.mxu0 %v200
    %825 = vmatprep.subr.mxu0 0.0
    %826 = vmatpush1.msra.mxu0 %v201
    %827 = vmatprep.subr.mxu0 0.0
    %828 = vmatpush1.msra.mxu0 %v202
    %829 = vmatprep.subr.mxu0 0.0
    %830 = vmatpush1.msra.mxu0 %v203
    %831 = vmatprep.subr.mxu0 0.0
    %832 = vmatpush1.msra.mxu0 %v204
    %833 = vmatprep.subr.mxu0 0.0
    %834 = vmatpush1.msra.mxu0 %v205
    %835 = vmatprep.subr.mxu0 0.0
    %836 = vmatpush1.msra.mxu0 0.0
    %837 = vmatprep.subr.mxu0 0.0
    %838 = vmatpush1.msra.mxu0 0.0
    %839 = vmatprep.subr.mxu0 0.0
    %840 = vmatpush1.msra.mxu0 0.0
    %841 = vmatprep.subr.mxu0 0.0
    %842 = vmatpush1.msra.mxu0 0.0
    %843 = vmatprep.subr.mxu0 0.0
    %844 = vmatpush1.msra.mxu0 0.0
    %845 = vmatprep.subr.mxu0 0.0
    %846 = vmatpush1.msra.mxu0 0.0
    %847 = vmatprep.subr.mxu0 0.0
    %848 = vmatpush1.msra.mxu0 0.0
    %849 = vmatprep.subr.mxu0 0.0
    %850 = vmatpush1.msra.mxu0 0.0
    %851 = vmatprep.subr.mxu0 0.0
    %852 = vmatpush1.msra.mxu0 0.0
    %853 = vmatprep.subr.mxu0 0.0
    %854 = vmatpush1.msra.mxu0 0.0
    %855 = vmatprep.subr.mxu0 0.0
    %856 = vmatpush1.msra.mxu0 0.0
    %857 = vmatprep.subr.mxu0 0.0
    %858 = vmatpush1.msra.mxu0 0.0
    %859 = vmatprep.subr.mxu0 0.0
    %860 = vmatpush1.msra.mxu0 0.0
    %861 = vmatprep.subr.mxu0 0.0
    %862 = vmatpush1.msra.mxu0 0.0
    %863 = vmatprep.subr.mxu0 0.0
    %864 = vmatpush1.msra.mxu0 0.0
    %865 = vmatprep.subr.mxu0 0.0
    %866 = vmatpush1.msra.mxu0 0.0
    %867 = vmatprep.subr.mxu0 0.0
    %868 = vmatpush1.msra.mxu0 0.0
    %869 = vmatprep.subr.mxu0 0.0
    %870 = vmatpush1.msra.mxu0 0.0
    %871 = vmatprep.subr.mxu0 0.0
    %872 = vmatpush1.msra.mxu0 0.0
    %873 = vmatprep.subr.mxu0 0.0
    %874 = vmatpush1.msra.mxu0 0.0
    %875 = vmatprep.subr.mxu0 0.0
    %876 = vmatpush1.msra.mxu0 0.0
    %877 = vmatprep.subr.mxu0 0.0
    %878 = vmatpush1.msra.mxu0 0.0
    %879 = vmatprep.subr.mxu0 0.0
    %880 = vmatpush1.msra.mxu0 0.0
    %881 = vmatprep.subr.mxu0 0.0
    %882 = vmatpush1.msra.mxu0 0.0
    %883 = vmatprep.mubr.f32.mxu0 0.0
    %884 = vmatmul.mubr.f32.gmra.mrb[0].mxu0 %v817
    %v885 = vpop.f32.mrb[0].mxu0
    %v886 = vadd.f32 0.0, %v885
    %v887 = vpop.f32.mrb[0].mxu0
    %888 = vdwg.mxu0
    %v889 = vmul.f32 %v886, 0.03125
    %v891 = vsel %vm354, %v813, 0
    %893 = vmatprep.subr.mxu0 0.0
    %894 = vmatpush1.msra.mxu0 %v198
    %895 = vmatprep.subr.mxu0 0.0
    %896 = vmatpush1.msra.mxu0 %v199
    %897 = vmatprep.subr.mxu0 0.0
    %898 = vmatpush1.msra.mxu0 %v200
    %899 = vmatprep.subr.mxu0 0.0
    %900 = vmatpush1.msra.mxu0 %v201
    %901 = vmatprep.subr.mxu0 0.0
    %902 = vmatpush1.msra.mxu0 %v202
    %903 = vmatprep.subr.mxu0 0.0
    %904 = vmatpush1.msra.mxu0 %v203
    %905 = vmatprep.subr.mxu0 0.0
    %906 = vmatpush1.msra.mxu0 %v204
    %907 = vmatprep.subr.mxu0 0.0
    %908 = vmatpush1.msra.mxu0 %v205
    %909 = vmatprep.subr.mxu0 0.0
    %910 = vmatpush1.msra.mxu0 0.0
    %911 = vmatprep.subr.mxu0 0.0
    %912 = vmatpush1.msra.mxu0 0.0
    %913 = vmatprep.subr.mxu0 0.0
    %914 = vmatpush1.msra.mxu0 0.0
    %915 = vmatprep.subr.mxu0 0.0
    %916 = vmatpush1.msra.mxu0 0.0
    %917 = vmatprep.subr.mxu0 0.0
    %918 = vmatpush1.msra.mxu0 0.0
    %919 = vmatprep.subr.mxu0 0.0
    %920 = vmatpush1.msra.mxu0 0.0
    %921 = vmatprep.subr.mxu0 0.0
    %922 = vmatpush1.msra.mxu0 0.0
    %923 = vmatprep.subr.mxu0 0.0
    %924 = vmatpush1.msra.mxu0 0.0
    %925 = vmatprep.subr.mxu0 0.0
    %926 = vmatpush1.msra.mxu0 0.0
    %927 = vmatprep.subr.mxu0 0.0
    %928 = vmatpush1.msra.mxu0 0.0
    %929 = vmatprep.subr.mxu0 0.0
    %930 = vmatpush1.msra.mxu0 0.0
    %931 = vmatprep.subr.mxu0 0.0
    %932 = vmatpush1.msra.mxu0 0.0
    %933 = vmatprep.subr.mxu0 0.0
    %934 = vmatpush1.msra.mxu0 0.0
    %935 = vmatprep.subr.mxu0 0.0
    %936 = vmatpush1.msra.mxu0 0.0
    %937 = vmatprep.subr.mxu0 0.0
    %938 = vmatpush1.msra.mxu0 0.0
    %939 = vmatprep.subr.mxu0 0.0
    %940 = vmatpush1.msra.mxu0 0.0
    %941 = vmatprep.subr.mxu0 0.0
    %942 = vmatpush1.msra.mxu0 0.0
    %943 = vmatprep.subr.mxu0 0.0
    %944 = vmatpush1.msra.mxu0 0.0
    %945 = vmatprep.subr.mxu0 0.0
    %946 = vmatpush1.msra.mxu0 0.0
    %947 = vmatprep.subr.mxu0 0.0
    %948 = vmatpush1.msra.mxu0 0.0
    %949 = vmatprep.subr.mxu0 0.0
    %950 = vmatpush1.msra.mxu0 0.0
    %951 = vmatprep.subr.mxu0 0.0
    %952 = vmatpush1.msra.mxu0 0.0
    %953 = vmatprep.subr.mxu0 0.0
    %954 = vmatpush1.msra.mxu0 0.0
    %955 = vmatprep.subr.mxu0 0.0
    %956 = vmatpush1.msra.mxu0 0.0
    %957 = vmatprep.mubr.f32.mxu0 0.0
    %958 = vmatmul.mubr.f32.gmra.mrb[0].mxu0 %v891
    %v959 = vpop.f32.mrb[0].mxu0
    %v960 = vadd.f32 0.0, %v959
    %v961 = vpop.f32.mrb[0].mxu0
    %962 = vdwg.mxu0
    %v963 = vmul.f32 %v960, 0.03125
    %v964 = vmul.f32 %v889, %v889
    %v965 = vsub.f32 %v963, %v964
    %v966 = vadd.f32 %v965, 1e-05
    %v967 = vrsqrt.pop %v966
    %v969 = vsel %vm507, %v889, 0
    %971 = vmatprep.subr.mxu0 0.0
    %972 = vmatpush1.msra.mxu0 %v513
    %973 = vmatprep.subr.mxu0 0.0
    %974 = vmatpush1.msra.mxu0 0.0
    %975 = vmatprep.subr.mxu0 0.0
    %976 = vmatpush1.msra.mxu0 0.0
    %977 = vmatprep.subr.mxu0 0.0
    %978 = vmatpush1.msra.mxu0 0.0
    %979 = vmatprep.subr.mxu0 0.0
    %980 = vmatpush1.msra.mxu0 0.0
    %981 = vmatprep.subr.mxu0 0.0
    %982 = vmatpush1.msra.mxu0 0.0
    %983 = vmatprep.subr.mxu0 0.0
    %984 = vmatpush1.msra.mxu0 0.0
    %985 = vmatprep.subr.mxu0 0.0
    %986 = vmatpush1.msra.mxu0 0.0
    %987 = vmatprep.subr.mxu0 0.0
    %988 = vmatpush1.msra.mxu0 0.0
    %989 = vmatprep.subr.mxu0 0.0
    %990 = vmatpush1.msra.mxu0 0.0
    %991 = vmatprep.subr.mxu0 0.0
    %992 = vmatpush1.msra.mxu0 0.0
    %993 = vmatprep.subr.mxu0 0.0
    %994 = vmatpush1.msra.mxu0 0.0
    %995 = vmatprep.subr.mxu0 0.0
    %996 = vmatpush1.msra.mxu0 0.0
    %997 = vmatprep.subr.mxu0 0.0
    %998 = vmatpush1.msra.mxu0 0.0
    %999 = vmatprep.subr.mxu0 0.0
    %1000 = vmatpush1.msra.mxu0 0.0
    %1001 = vmatprep.subr.mxu0 0.0
    %1002 = vmatpush1.msra.mxu0 0.0
    %1003 = vmatprep.subr.mxu0 0.0
    %1004 = vmatpush1.msra.mxu0 0.0
    %1005 = vmatprep.subr.mxu0 0.0
    %1006 = vmatpush1.msra.mxu0 0.0
    %1007 = vmatprep.subr.mxu0 0.0
    %1008 = vmatpush1.msra.mxu0 0.0
    %1009 = vmatprep.subr.mxu0 0.0
    %1010 = vmatpush1.msra.mxu0 0.0
    %1011 = vmatprep.subr.mxu0 0.0
    %1012 = vmatpush1.msra.mxu0 0.0
    %1013 = vmatprep.subr.mxu0 0.0
    %1014 = vmatpush1.msra.mxu0 0.0
    %1015 = vmatprep.subr.mxu0 0.0
    %1016 = vmatpush1.msra.mxu0 0.0
    %1017 = vmatprep.subr.mxu0 0.0
    %1018 = vmatpush1.msra.mxu0 0.0
    %1019 = vmatprep.subr.mxu0 0.0
    %1020 = vmatpush1.msra.mxu0 0.0
    %1021 = vmatprep.subr.mxu0 0.0
    %1022 = vmatpush1.msra.mxu0 0.0
    %1023 = vmatprep.subr.mxu0 0.0
    %1024 = vmatpush1.msra.mxu0 0.0
    %1025 = vmatprep.subr.mxu0 0.0
    %1026 = vmatpush1.msra.mxu0 0.0
    %1027 = vmatprep.subr.mxu0 0.0
    %1028 = vmatpush1.msra.mxu0 0.0
    %1029 = vmatprep.subr.mxu0 0.0
    %1030 = vmatpush1.msra.mxu0 0.0
    %1031 = vmatprep.subr.mxu0 0.0
    %1032 = vmatpush1.msra.mxu0 0.0
    %1033 = vmatprep.subr.mxu0 0.0
    %1034 = vmatpush1.msra.mxu0 0.0
    %1035 = vmatprep.mubr.f32.mxu0 0.0
    %1036 = vmatmul.mubr.f32.gmra.mrb[0].mxu0 %v969
    %v1037 = vpop.f32.mrb[0].mxu0
    %v1038 = vadd.f32 0.0, %v1037
    %v1039 = vpop.f32.mrb[0].mxu0
    %1040 = vdwg.mxu0
    %v1042 = vsel %vm507, %v967, 0
    %1044 = vmatprep.subr.mxu0 0.0
    %1045 = vmatpush1.msra.mxu0 %v513
    %1046 = vmatprep.subr.mxu0 0.0
    %1047 = vmatpush1.msra.mxu0 0.0
    %1048 = vmatprep.subr.mxu0 0.0
    %1049 = vmatpush1.msra.mxu0 0.0
    %1050 = vmatprep.subr.mxu0 0.0
    %1051 = vmatpush1.msra.mxu0 0.0
    %1052 = vmatprep.subr.mxu0 0.0
    %1053 = vmatpush1.msra.mxu0 0.0
    %1054 = vmatprep.subr.mxu0 0.0
    %1055 = vmatpush1.msra.mxu0 0.0
    %1056 = vmatprep.subr.mxu0 0.0
    %1057 = vmatpush1.msra.mxu0 0.0
    %1058 = vmatprep.subr.mxu0 0.0
    %1059 = vmatpush1.msra.mxu0 0.0
    %1060 = vmatprep.subr.mxu0 0.0
    %1061 = vmatpush1.msra.mxu0 0.0
    %1062 = vmatprep.subr.mxu0 0.0
    %1063 = vmatpush1.msra.mxu0 0.0
    %1064 = vmatprep.subr.mxu0 0.0
    %1065 = vmatpush1.msra.mxu0 0.0
    %1066 = vmatprep.subr.mxu0 0.0
    %1067 = vmatpush1.msra.mxu0 0.0
    %1068 = vmatprep.subr.mxu0 0.0
    %1069 = vmatpush1.msra.mxu0 0.0
    %1070 = vmatprep.subr.mxu0 0.0
    %1071 = vmatpush1.msra.mxu0 0.0
    %1072 = vmatprep.subr.mxu0 0.0
    %1073 = vmatpush1.msra.mxu0 0.0
    %1074 = vmatprep.subr.mxu0 0.0
    %1075 = vmatpush1.msra.mxu0 0.0
    %1076 = vmatprep.subr.mxu0 0.0
    %1077 = vmatpush1.msra.mxu0 0.0
    %1078 = vmatprep.subr.mxu0 0.0
    %1079 = vmatpush1.msra.mxu0 0.0
    %1080 = vmatprep.subr.mxu0 0.0
    %1081 = vmatpush1.msra.mxu0 0.0
    %1082 = vmatprep.subr.mxu0 0.0
    %1083 = vmatpush1.msra.mxu0 0.0
    %1084 = vmatprep.subr.mxu0 0.0
    %1085 = vmatpush1.msra.mxu0 0.0
    %1086 = vmatprep.subr.mxu0 0.0
    %1087 = vmatpush1.msra.mxu0 0.0
    %1088 = vmatprep.subr.mxu0 0.0
    %1089 = vmatpush1.msra.mxu0 0.0
    %1090 = vmatprep.subr.mxu0 0.0
    %1091 = vmatpush1.msra.mxu0 0.0
    %1092 = vmatprep.subr.mxu0 0.0
    %1093 = vmatpush1.msra.mxu0 0.0
    %1094 = vmatprep.subr.mxu0 0.0
    %1095 = vmatpush1.msra.mxu0 0.0
    %1096 = vmatprep.subr.mxu0 0.0
    %1097 = vmatpush1.msra.mxu0 0.0
    %1098 = vmatprep.subr.mxu0 0.0
    %1099 = vmatpush1.msra.mxu0 0.0
    %1100 = vmatprep.subr.mxu0 0.0
    %1101 = vmatpush1.msra.mxu0 0.0
    %1102 = vmatprep.subr.mxu0 0.0
    %1103 = vmatpush1.msra.mxu0 0.0
    %1104 = vmatprep.subr.mxu0 0.0
    %1105 = vmatpush1.msra.mxu0 0.0
    %1106 = vmatprep.subr.mxu0 0.0
    %1107 = vmatpush1.msra.mxu0 0.0
    %1108 = vmatprep.mubr.f32.mxu0 0.0
    %1109 = vmatmul.mubr.f32.gmra.mrb[0].mxu0 %v1042
    %v1110 = vpop.f32.mrb[0].mxu0
    %v1111 = vadd.f32 0.0, %v1110
    %v1112 = vpop.f32.mrb[0].mxu0
    %1113 = vdwg.mxu0
    %v1114 = vmul.f32 %v1111, %v673
    %v1115 = vmul.f32 %v1038, %v1114
    %v1116 = vsub.f32 %v674, %v1115
    %v1117 = vlaneseq
    %v1118 = vshrl.u32 %v1117, 7
    %v1119 = vsub.s32 0, %v1118
    %v1120 = vrot.slane %v1114, %v1119
    %v1121 = vmul.f32 %v195, %v1120
    %v1123 = vlaneseq
    %v1124 = vshrl.u32 %v1123, 7
    %v1125 = vsub.s32 0, %v1124
    %v1126 = vrot.slane %v1116, %v1125
    %v1128 = vadd.f32 %v1121, %v1126
    %v1129 = vxor.u32 %v1128, 2147483648
    %v1130 = vmul.f32 %v1129, 1.442695
    %v1131 = vpow.pop %v1130
    %v1132 = vadd.f32 %v1131, 1.0
    %v1133 = vrcp.pop %v1132
    %v1134 = vmul.f32 1.0, %v1133
    %v1135 = vmul.f32 %v672, %v1134
    %1136 = vst.msk [vmem:[#allocation5] sm:$0xff] %vm354, %v1135
    // Predicated region
    $region42: #{tpu_custom_call.1} parent=1 // pred_check
      _
    $region43: #{tpu_custom_call.1} parent=1 // pred_check_branch
      %1138 = sbr.rel (0) target = $region45
    $region44: #{tpu_custom_call.1} parent=1 // pred_region
      %s1140 = ssub.s32 128, 128
      %1141 = vsyncadd [#allocation4], %s1140
      %s1143 = sshll.u32 [#allocation5], 4
      %s1144 = int_to_ptr.vmem [resolvable:$true] %s1143
      %1146 = dma.vmem_to_hbm [thread:$0]  %s1144, 128, %s9, [#allocation4]
    $region45: #{tpu_custom_call.1} parent=1 // pred_fallthru
      _
    // Predicated region
    $region46: #{tpu_custom_call.1} parent=1 // pred_check
      _
    $region47: #{tpu_custom_call.1} parent=1 // pred_check_branch
      %1148 = sbr.rel (0) target = $region49
    $region48: #{tpu_custom_call.1} parent=1 // pred_region
      %1149 = dma.done [#allocation4], 128
    $region49: #{tpu_custom_call.1} parent=1 // pred_fallthru
      _
    %1150 = vsyncpa [#allocation3], 1
    %1151 = vsyncpa [#allocation4], 1

</llo_original>
